<compile_context>
chip_gen: v6e
topology: v6e:2x2x1
jax: 0.10.0
libtpu: 0.0.40
codegen_flags: <defaults>
</compile_context>

<pallas_src>
import functools

import jax
import jax.numpy as jnp
from jax import lax
from jax.experimental import pallas as pl
from jax.experimental.pallas import tpu as pltpu

_LANES = 128
_SUBLANES = 8


def _round_up(x, m):
    return ((x + m - 1) // m) * m


def _cdiv(a, b):
    return (a + b - 1) // b


def _int_pow(x, n):
    """x ** n for non-negative integer n, as unrolled VPU multiplies."""
    if n == 0:
        return jnp.ones_like(x)
    acc, base = None, x
    while n > 0:
        if n & 1:
            acc = base if acc is None else acc * base
        n >>= 1
        if n:
            base = base * base
    return acc


def _focal_from_loss(row_loss, gamma):
    p = jnp.exp(-row_loss)
    w = 1.0 - p
    g = float(gamma)
    if g.is_integer() and g >= 0:
        wg = _int_pow(w, int(g))        # VPU multiplies (gamma=2 -> w*w)
    else:
        wg = w ** g                     # non-integer gamma: pow fallback (EUP)
    return wg * row_loss


def _focal_kernel_folded(o_ref, t_ref, seg_ref, out_ref, *, gamma, n_rows, tr):
    """Lane-dense path (128 % D == 0).

    o_ref, t_ref : (tr, 128) tiles; each 128-lane row packs 128 // D feature rows.
    seg_ref      : (128, 128) block-diagonal ones matrix (segment-sum matmul).
    out_ref      : (1, 1, 128) per-grid-step partial sums (lane dense).
    """
    diff = o_ref[...].astype(jnp.float32) - t_ref[...].astype(jnp.float32)
    sq = diff * diff                                              # (tr, 128)
    # Segmented lane reduce on the MXU: each lane receives its own segment's
    # (= original row's) squared-error sum, replicated D times across the segment.
    row_loss = jnp.dot(sq, seg_ref[...],
                       preferred_element_type=jnp.float32,
                       precision=lax.Precision.HIGHEST)           # (tr, 128)
    focal = _focal_from_loss(row_loss, gamma)                     # (tr, 128)

    if n_rows % tr != 0:
        # Only the last block can read past the end of the array: mask garbage.
        limit = n_rows - pl.program_id(0) * tr
        rows = lax.broadcasted_iota(jnp.int32, focal.shape, 0)
        focal = jnp.where(rows < limit, focal, 0.0)

    # Sublane-only reduce keeps per-step work on the VPU; the tiny cross-lane /
    # cross-block reduction happens in plain JAX outside the kernel.
    out_ref[...] = jnp.sum(focal, axis=0, keepdims=True).reshape(1, 1, _LANES)


def _focal_kernel_rows(o_ref, t_ref, out_ref, *, gamma, n_rows, tr):
    """General-D fallback: one (tr, D) row tile per grid step."""
    diff = o_ref[...].astype(jnp.float32) - t_ref[...].astype(jnp.float32)
    sq = diff * diff                                              # (tr, D)
    row_loss = jnp.sum(sq, axis=-1, keepdims=True)                # (tr, 1)
    focal = _focal_from_loss(row_loss, gamma)                     # (tr, 1)

    if n_rows % tr != 0:
        limit = n_rows - pl.program_id(0) * tr
        rows = lax.broadcasted_iota(jnp.int32, focal.shape, 0)
        focal = jnp.where(rows < limit, focal, 0.0)

    out_ref[...] = jnp.sum(focal, axis=0, keepdims=True).reshape(1, 1, 1)


def focal_loss(outputs, targets, gamma=2, reduction="mean",
               *, target_tile_bytes=4 * 1024 * 1024):
    assert outputs.shape == targets.shape and outputs.ndim == 3
    B, S, D = outputs.shape
    n_items = B * S

    if reduction == "mean":
        denom = float(n_items)
    elif reduction == "sum":
        denom = 1.0
    else:
        # TODO(synk): reduction='none' would need a (B, S) output spec; only
        # 'mean' and 'sum' are implemented here.
        raise NotImplementedError("reduction='none' not implemented")

    compiler_params = pltpu.CompilerParams(
        # Each grid step writes its own partial block -> fully parallel grid
        # (lets both TensorCores stream HBM on v7x; harmless on v5e/v6e).
        dimension_semantics=("parallel",),
        # 2 inputs x 2 pipeline buffers x ~4 MiB tiles + slack; raises the
        # 16/32 MiB scoped default while staying well under v7x's 64 MiB VMEM.
        vmem_limit_bytes=48 * 1024 * 1024,
    )

    use_folded = (D < _LANES) and (_LANES % D == 0)

    if use_folded:
        # Repack lane-dense: fold (128 // D) feature rows into each 128-lane row.
        o_flat = outputs.reshape(-1)
        t_flat = targets.reshape(-1)
        total = n_items * D
        padded = _round_up(total, _LANES * _SUBLANES)
        if padded != total:
            # Zero rows contribute exactly 0 focal loss, so padding is harmless.
            o_flat = jnp.pad(o_flat, (0, padded - total))
            t_flat = jnp.pad(t_flat, (0, padded - total))
        nf = padded // _LANES                       # folded rows (multiple of 8)
        o2 = o_flat.reshape(nf, _LANES)
        t2 = t_flat.reshape(nf, _LANES)

        # ~target_tile_bytes per input tile, multiple of 8 sublanes.
        tr = max(_SUBLANES,
                 (target_tile_bytes // (_LANES * 4)) // _SUBLANES * _SUBLANES)
        tr = min(tr, _round_up(nf, _SUBLANES))
        grid = _cdiv(nf, tr)

        # Block-diagonal ones matrix: segmented lane reduce as an MXU matmul.
        lane = jnp.arange(_LANES, dtype=jnp.int32)
        seg = (lane[:, None] // D == lane[None, :] // D).astype(jnp.float32)

        kernel = functools.partial(_focal_kernel_folded, gamma=gamma,
                                   n_rows=nf, tr=tr)
        partials = pl.pallas_call(
            kernel,
            out_shape=jax.ShapeDtypeStruct((grid, 1, _LANES), jnp.float32),
            grid_spec=pltpu.PrefetchScalarGridSpec(
                num_scalar_prefetch=0,
                grid=(grid,),
                in_specs=[
                    pl.BlockSpec((tr, _LANES), lambda i: (i, 0)),
                    pl.BlockSpec((tr, _LANES), lambda i: (i, 0)),
                    pl.BlockSpec((_LANES, _LANES), lambda i: (0, 0)),
                ],
                out_specs=pl.BlockSpec((1, 1, _LANES), lambda i: (i, 0, 0)),
            ),
            compiler_params=compiler_params,
        )(o2, t2, seg)
        # Every row's focal value was replicated D times across its lane segment.
        total_focal = jnp.sum(partials) / float(D)
    else:
        o2 = outputs.reshape(n_items, D)
        t2 = targets.reshape(n_items, D)
        tr = max(_SUBLANES,
                 (target_tile_bytes // (D * 4)) // _SUBLANES * _SUBLANES)
        tr = min(tr, _round_up(n_items, _SUBLANES))
        grid = _cdiv(n_items, tr)

        kernel = functools.partial(_focal_kernel_rows, gamma=gamma,
                                   n_rows=n_items, tr=tr)
        partials = pl.pallas_call(
            kernel,
            out_shape=jax.ShapeDtypeStruct((grid, 1, 1), jnp.float32),
            grid_spec=pltpu.PrefetchScalarGridSpec(
                num_scalar_prefetch=0,
                grid=(grid,),
                in_specs=[
                    pl.BlockSpec((tr, D), lambda i: (i, 0)),
                    pl.BlockSpec((tr, D), lambda i: (i, 0)),
                ],
                out_specs=pl.BlockSpec((1, 1, 1), lambda i: (i, 0, 0)),
            ),
            compiler_params=compiler_params,
        )(o2, t2)
        total_focal = jnp.sum(partials)

    return total_focal / denom


def _focal_loss_ref(outputs, targets, gamma=2, reduction="mean"):
    _loss = jnp.sum((outputs - targets) ** 2, axis=2)
    _p = jnp.exp(-_loss)
    loss = ((1.0 - _p) ** gamma) * _loss
    return jnp.mean(loss) if reduction == "mean" else jnp.sum(loss)


if __name__ == "__main__":
    B, S, D = 2, 8, 32
    key = jax.random.PRNGKey(0)
    k1, k2 = jax.random.split(key)
    outputs = jax.random.normal(k1, (B, S, D), dtype=jnp.float32) * 0.3
    targets = jax.random.normal(k2, (B, S, D), dtype=jnp.float32) * 0.3

    loss = focal_loss(outputs, targets, gamma=2, reduction="mean")
    loss = jax.block_until_ready(loss)

    ref = _focal_loss_ref(outputs, targets, gamma=2, reduction="mean")
    assert jnp.allclose(loss, ref, rtol=1e-4, atol=1e-6), (loss, ref)
    print("KERNEL_OK")
</pallas_src>

<mosaic_0001>
module attributes {stable_mosaic.version = 11 : i64} {
  func.func @_focal_kernel_folded(%arg0: i32, %arg1: memref<8x128xf32, #tpu.memory_space<vmem>>, %arg2: memref<8x128xf32, #tpu.memory_space<vmem>>, %arg3: memref<128x128xf32, #tpu.memory_space<vmem>>, %arg4: memref<1x1x128xf32, #tpu.memory_space<vmem>>) attributes {dimension_semantics = [#tpu.dimension_semantics<parallel>], iteration_bounds = array<i64: 1>, scalar_prefetch = 0 : i64, scratch_operands = 0 : i64, tpu.core_type = #tpu.core_type<tc>, window_params = [{transform_indices = @transform_0, window_bounds = array<i64: 8, 128>}, {transform_indices = @transform_1, window_bounds = array<i64: 8, 128>}, {pipeline_mode = #tpu.pipeline_mode<synchronous>, transform_indices = @transform_2, window_bounds = array<i64: 128, 128>}, {transform_indices = @transform_3, window_bounds = array<i64: 1, 1, 128>}]} {
    %c0 = arith.constant 0 : index
    %c0_0 = arith.constant 0 : index
    %0 = vector.load %arg1[%c0, %c0_0] : memref<8x128xf32, #tpu.memory_space<vmem>>, vector<8x128xf32>
    %c0_1 = arith.constant 0 : index
    %c0_2 = arith.constant 0 : index
    %1 = vector.load %arg2[%c0_1, %c0_2] : memref<8x128xf32, #tpu.memory_space<vmem>>, vector<8x128xf32>
    %2 = arith.subf %0, %1 : vector<8x128xf32>
    %3 = arith.mulf %2, %2 : vector<8x128xf32>
    %c0_3 = arith.constant 0 : index
    %c0_4 = arith.constant 0 : index
    %4 = vector.load %arg3[%c0_3, %c0_4] : memref<128x128xf32, #tpu.memory_space<vmem>>, vector<128x128xf32>
    %cst = arith.constant dense<0.000000e+00> : vector<8x128xf32>
    %5 = tpu.matmul %3, %4, %cst {dimension_numbers = #tpu.dot_dimension_numbers<[1], [0], [0], [1], [0, 0, 1, 1], [], []>, precision = #tpu.contract_precision<fp32>} : vector<8x128xf32>, vector<128x128xf32>, vector<8x128xf32> -> vector<8x128xf32>
    %cst_5 = arith.constant 0.000000e+00 : f32
    %6 = vector.broadcast %cst_5 : f32 to vector<8x128xf32>
    %7 = arith.subf %6, %5 : vector<8x128xf32>
    %8 = math.exp %7 : vector<8x128xf32>
    %cst_6 = arith.constant 1.000000e+00 : f32
    %9 = vector.broadcast %cst_6 : f32 to vector<8x128xf32>
    %10 = arith.subf %9, %8 : vector<8x128xf32>
    %11 = arith.mulf %10, %10 : vector<8x128xf32>
    %12 = arith.mulf %11, %5 : vector<8x128xf32>
    %cst_7 = arith.constant dense<0.000000e+00> : vector<128xf32>
    %13 = vector.multi_reduction <add>, %12, %cst_7 [0] : vector<8x128xf32> to vector<128xf32>
    %14 = vector.shape_cast %13 : vector<128xf32> to vector<1x128xf32>
    %15 = vector.shape_cast %14 : vector<1x128xf32> to vector<1x1x128xf32>
    %c0_8 = arith.constant 0 : index
    %c0_9 = arith.constant 0 : index
    %c0_10 = arith.constant 0 : index
    %16 = vector.load %arg4[%c0_8, %c0_9, %c0_10] : memref<1x1x128xf32, #tpu.memory_space<vmem>>, vector<1x1x128xf32>
    tpu.vector_store %arg4[%c0_8, %c0_9, %c0_10], %15 {strides = array<i32>} : memref<1x1x128xf32, #tpu.memory_space<vmem>>, vector<1x1x128xf32>,
    return
  }
  func.func @transform_0(%arg0: i32) -> (i32, i32) {
    %c0_i32 = arith.constant 0 : i32
    %c0_i32_0 = arith.constant 0 : i32
    return %arg0, %c0_i32 : i32, i32
  }
  func.func @transform_1(%arg0: i32) -> (i32, i32) {
    %c0_i32 = arith.constant 0 : i32
    %c0_i32_0 = arith.constant 0 : i32
    return %arg0, %c0_i32 : i32, i32
  }
  func.func @transform_2(%arg0: i32) -> (i32, i32) {
    %c0_i32 = arith.constant 0 : i32
    %c0_i32_0 = arith.constant 0 : i32
    %c0_i32_1 = arith.constant 0 : i32
    return %c0_i32, %c0_i32_0 : i32, i32
  }
  func.func @transform_3(%arg0: i32) -> (i32, i32, i32) {
    %c0_i32 = arith.constant 0 : i32
    %c0_i32_0 = arith.constant 0 : i32
    %c0_i32_1 = arith.constant 0 : i32
    return %arg0, %c0_i32, %c0_i32_0 : i32, i32, i32
  }
}

</mosaic_0001>

<llo_original>
// kernel: tpu_custom_call.1
$region0: #{tpu_custom_call.1}
  #allocation0 [shape = 'u32[]', space=smem, size = 0x4, offset = 0x4, fixed_abs, tag = 'smem constant byte address 0x4 - core index']
  #allocation1 [shape = 'u32[144,128]{1,0:T(1,128)}', space=vmem, size = 0x12000, scoped, tag = 'internal scratch']
  %s0 = inlined_call_operand.hbm [shape: f32[8,128], index: 0, kind: input, shape index: {}]
  %s1 = inlined_call_operand.hbm [shape: f32[8,128], index: 1, kind: input, shape index: {}]
  %s2 = inlined_call_operand.hbm [shape: f32[128,128], index: 2, kind: input, shape index: {}]
  %s3 = inlined_call_operand.hbm [shape: f32[1,1,128], index: 3, kind: output, shape index: {}]
  %s4 = sld [smem:[#allocation0]]
  $region34: #{tpu_custom_call.1} parent=0
    _
  %s6 = ssub.s32 1, %s4
  %s7 = scalar_select 0, %s6, %s4
  $region1: #{tpu_custom_call.1} parent=0
    #allocation2 [shape = 'u8[4096]{0}', space=vmem, size = 0x1000, scoped, tag = 'input window, operand 0, single buffered']
    #allocation3 [shape = 's32[1]{0}', space=sflag, size = 0x4, scoped, tag = 'scoped memory for tpu_custom_call.1']
    #allocation4 [shape = 's32[1]{0}', space=sflag, size = 0x4, scoped, tag = 'scoped memory for tpu_custom_call.1']
    #allocation5 [shape = 'u8[4096]{0}', space=vmem, size = 0x1000, scoped, tag = 'input window, operand 1, single buffered']
    #allocation6 [shape = 's32[1]{0}', space=sflag, size = 0x4, scoped, tag = 'scoped memory for tpu_custom_call.1']
    #allocation7 [shape = 'u8[65536]{0}', space=vmem, size = 0x10000, scoped, tag = 'input window, operand 2, single buffered']
    #allocation8 [shape = 'u8[512]{0}', space=vmem, size = 0x400, scoped, tag = 'output window, operand 0, single buffered']
    %8 = vsyncpa [#allocation3], 0
    %9 = vsyncpa [#allocation6], 0
    %10 = vsyncpa [#allocation4], 0
    // Predicated region
    $region2: #{tpu_custom_call.1} parent=1 // pred_check
      _
    $region3: #{tpu_custom_call.1} parent=1 // pred_check_branch
      %12 = sbr.rel (0) target = $region5
    $region4: #{tpu_custom_call.1} parent=1 // pred_region
      %s14 = ssub.s32 128, 128
      %15 = vsyncadd [#allocation3], %s14
      %s17 = sshll.u32 [#allocation2], 4
      %s18 = int_to_ptr.vmem [resolvable:$true] %s17
      %20 = dma.hbm_to_vmem [thread:$0]  %s0, 128, %s18, [#allocation3]
    $region5: #{tpu_custom_call.1} parent=1 // pred_fallthru
      _
    // Predicated region
    $region6: #{tpu_custom_call.1} parent=1 // pred_check
      _
    $region7: #{tpu_custom_call.1} parent=1 // pred_check_branch
      %22 = sbr.rel (0) target = $region9
    $region8: #{tpu_custom_call.1} parent=1 // pred_region
      %s24 = ssub.s32 128, 128
      %25 = vsyncadd [#allocation6], %s24
      %s27 = sshll.u32 [#allocation5], 4
      %s28 = int_to_ptr.vmem [resolvable:$true] %s27
      %30 = dma.hbm_to_vmem [thread:$0]  %s1, 128, %s28, [#allocation6]
    $region9: #{tpu_custom_call.1} parent=1 // pred_fallthru
      _
    // Predicated region
    $region10: #{tpu_custom_call.1} parent=1 // pred_check
      _
    $region11: #{tpu_custom_call.1} parent=1 // pred_check_branch
      %32 = sbr.rel (0) target = $region13
    $region12: #{tpu_custom_call.1} parent=1 // pred_region
      %s34 = ssub.s32 2048, 2048
      %35 = vsyncadd [#allocation6], %s34
      %s36 = sshll.u32 [#allocation7], 4
      %s37 = int_to_ptr.vmem [resolvable:$true] %s36
      %42 = dma.hbm_to_vmem [thread:$0]  %s2, 2048, %s37, [#allocation6], 128, 128, 8
    $region13: #{tpu_custom_call.1} parent=1 // pred_fallthru
      _
    // Predicated region
    $region14: #{tpu_custom_call.1} parent=1 // pred_check
      _
    $region15: #{tpu_custom_call.1} parent=1 // pred_check_branch
      %44 = sbr.rel (0) target = $region17
    $region16: #{tpu_custom_call.1} parent=1 // pred_region
      %45 = dma.done [#allocation3], 128
    $region17: #{tpu_custom_call.1} parent=1 // pred_fallthru
      _
    // Predicated region
    $region18: #{tpu_custom_call.1} parent=1 // pred_check
      _
    $region19: #{tpu_custom_call.1} parent=1 // pred_check_branch
      %47 = sbr.rel (0) target = $region21
    $region20: #{tpu_custom_call.1} parent=1 // pred_region
      %48 = dma.done [#allocation6], 128
    $region21: #{tpu_custom_call.1} parent=1 // pred_fallthru
      _
    // Predicated region
    $region22: #{tpu_custom_call.1} parent=1 // pred_check
      _
    $region23: #{tpu_custom_call.1} parent=1 // pred_check_branch
      %50 = sbr.rel (0) target = $region25
    $region24: #{tpu_custom_call.1} parent=1 // pred_region
      %51 = dma.done [#allocation6], 2048
    $region25: #{tpu_custom_call.1} parent=1 // pred_fallthru
      _
    %v52 = vld [vmem:[#allocation2] sm:$0xff]
    %v53 = vld [vmem:[#allocation5] sm:$0xff]
    %v54 = vsub.f32 %v52, %v53
    %v55 = vmul.f32 %v54, %v54
    %v56 = vld [vmem:[#allocation7] sm:$0xff]
    %v57 = vld [vmem:[#allocation7 + $0x8] sm:$0xff]
    %v58 = vld [vmem:[#allocation7 + $0x10] sm:$0xff]
    %v59 = vld [vmem:[#allocation7 + $0x18] sm:$0xff]
    %v60 = vld [vmem:[#allocation7 + $0x20] sm:$0xff]
    %v61 = vld [vmem:[#allocation7 + $0x28] sm:$0xff]
    %v62 = vld [vmem:[#allocation7 + $0x30] sm:$0xff]
    %v63 = vld [vmem:[#allocation7 + $0x38] sm:$0xff]
    %v64 = vld [vmem:[#allocation7 + $0x40] sm:$0xff]
    %v65 = vld [vmem:[#allocation7 + $0x48] sm:$0xff]
    %v66 = vld [vmem:[#allocation7 + $0x50] sm:$0xff]
    %v67 = vld [vmem:[#allocation7 + $0x58] sm:$0xff]
    %v68 = vld [vmem:[#allocation7 + $0x60] sm:$0xff]
    %v69 = vld [vmem:[#allocation7 + $0x68] sm:$0xff]
    %v70 = vld [vmem:[#allocation7 + $0x70] sm:$0xff]
    %v71 = vld [vmem:[#allocation7 + $0x78] sm:$0xff]
    %72 = vmatprep.subr.mxu0 0.0
    %v73 = vand.u32 %v71, 4294901760
    %74 = vmatpush1.msra.mxu0 %v73
    %75 = vmatprep.subr.mxu0 0.0
    %v76 = vand.u32 %v70, 4294901760
    %77 = vmatpush1.msra.mxu0 %v76
    %78 = vmatprep.subr.mxu0 0.0
    %v79 = vand.u32 %v69, 4294901760
    %80 = vmatpush1.msra.mxu0 %v79
    %81 = vmatprep.subr.mxu0 0.0
    %v82 = vand.u32 %v68, 4294901760
    %83 = vmatpush1.msra.mxu0 %v82
    %84 = vmatprep.subr.mxu0 0.0
    %v85 = vand.u32 %v67, 4294901760
    %86 = vmatpush1.msra.mxu0 %v85
    %87 = vmatprep.subr.mxu0 0.0
    %v88 = vand.u32 %v66, 4294901760
    %89 = vmatpush1.msra.mxu0 %v88
    %90 = vmatprep.subr.mxu0 0.0
    %v91 = vand.u32 %v65, 4294901760
    %92 = vmatpush1.msra.mxu0 %v91
    %93 = vmatprep.subr.mxu0 0.0
    %v94 = vand.u32 %v64, 4294901760
    %95 = vmatpush1.msra.mxu0 %v94
    %96 = vmatprep.subr.mxu0 0.0
    %v97 = vand.u32 %v63, 4294901760
    %98 = vmatpush1.msra.mxu0 %v97
    %99 = vmatprep.subr.mxu0 0.0
    %v100 = vand.u32 %v62, 4294901760
    %101 = vmatpush1.msra.mxu0 %v100
    %102 = vmatprep.subr.mxu0 0.0
    %v103 = vand.u32 %v61, 4294901760
    %104 = vmatpush1.msra.mxu0 %v103
    %105 = vmatprep.subr.mxu0 0.0
    %v106 = vand.u32 %v60, 4294901760
    %107 = vmatpush1.msra.mxu0 %v106
    %108 = vmatprep.subr.mxu0 0.0
    %v109 = vand.u32 %v59, 4294901760
    %110 = vmatpush1.msra.mxu0 %v109
    %111 = vmatprep.subr.mxu0 0.0
    %v112 = vand.u32 %v58, 4294901760
    %113 = vmatpush1.msra.mxu0 %v112
    %114 = vmatprep.subr.mxu0 0.0
    %v115 = vand.u32 %v57, 4294901760
    %116 = vmatpush1.msra.mxu0 %v115
    %117 = vmatprep.subr.mxu0 0.0
    %v118 = vand.u32 %v56, 4294901760
    %119 = vmatpush1.msra.mxu0 %v118
    %120 = vmatprep.subr.mxu0 0.0
    %121 = vmatpush2.msra.mxu0 0.0
    %122 = vmatprep.subr.mxu0 0.0
    %123 = vmatpush2.msra.mxu0 0.0
    %124 = vmatprep.subr.mxu0 0.0
    %125 = vmatpush2.msra.mxu0 0.0
    %126 = vmatprep.subr.mxu0 0.0
    %127 = vmatpush2.msra.mxu0 0.0
    %128 = vmatprep.subr.mxu0 0.0
    %129 = vmatpush2.msra.mxu0 0.0
    %130 = vmatprep.subr.mxu0 0.0
    %131 = vmatpush2.msra.mxu0 0.0
    %132 = vmatprep.subr.mxu0 0.0
    %133 = vmatpush2.msra.mxu0 0.0
    %134 = vmatprep.subr.mxu0 0.0
    %135 = vmatpush2.msra.mxu0 0.0
    %136 = vmatprep.subr.mxu0 0.0
    %137 = vmatpush2.msra.mxu0 0.0
    %138 = vmatprep.subr.mxu0 0.0
    %139 = vmatpush2.msra.mxu0 0.0
    %140 = vmatprep.subr.mxu0 0.0
    %141 = vmatpush2.msra.mxu0 0.0
    %142 = vmatprep.subr.mxu0 0.0
    %143 = vmatpush2.msra.mxu0 0.0
    %144 = vmatprep.subr.mxu0 0.0
    %145 = vmatpush2.msra.mxu0 0.0
    %146 = vmatprep.subr.mxu0 0.0
    %147 = vmatpush2.msra.mxu0 0.0
    %148 = vmatprep.subr.mxu0 0.0
    %149 = vmatpush2.msra.mxu0 0.0
    %150 = vmatprep.subr.mxu0 0.0
    %151 = vmatpush2.msra.mxu0 0.0
    %152 = vmatprep.mubr.f32.mxu0 0.0
    %v153 = vand.u32 %v55, 4294901760
    %v154 = vsub.f32 %v55, %v153
    %v155 = vand.u32 %v154, 4294901760
    %v156 = vsub.f32 %v154, %v155
    %v157 = vand.u32 %v156, 4294901760
    %158 = vmatmul.mubr.f32.gmra.mxu0 %v157
    %v159 = vpop.f32.mrf.mxu0
    %v160 = vadd.f32 0.0, %v159
    %v161 = vpop.f32.mrf.mxu0
    %162 = vdwg.mxu0
    %163 = vmatprep.subr.mxu0 0.0
    %v164 = vand.u32 %v71, 4294901760
    %v165 = vsub.f32 %v71, %v164
    %v166 = vand.u32 %v165, 4294901760
    %v167 = vsub.f32 %v165, %v166
    %v168 = vand.u32 %v167, 4294901760
    %169 = vmatpush1.msra.mxu0 %v168
    %170 = vmatprep.subr.mxu0 0.0
    %v171 = vand.u32 %v70, 4294901760
    %v172 = vsub.f32 %v70, %v171
    %v173 = vand.u32 %v172, 4294901760
    %v174 = vsub.f32 %v172, %v173
    %v175 = vand.u32 %v174, 4294901760
    %176 = vmatpush1.msra.mxu0 %v175
    %177 = vmatprep.subr.mxu0 0.0
    %v178 = vand.u32 %v69, 4294901760
    %v179 = vsub.f32 %v69, %v178
    %v180 = vand.u32 %v179, 4294901760
    %v181 = vsub.f32 %v179, %v180
    %v182 = vand.u32 %v181, 4294901760
    %183 = vmatpush1.msra.mxu0 %v182
    %184 = vmatprep.subr.mxu0 0.0
    %v185 = vand.u32 %v68, 4294901760
    %v186 = vsub.f32 %v68, %v185
    %v187 = vand.u32 %v186, 4294901760
    %v188 = vsub.f32 %v186, %v187
    %v189 = vand.u32 %v188, 4294901760
    %190 = vmatpush1.msra.mxu0 %v189
    %191 = vmatprep.subr.mxu0 0.0
    %v192 = vand.u32 %v67, 4294901760
    %v193 = vsub.f32 %v67, %v192
    %v194 = vand.u32 %v193, 4294901760
    %v195 = vsub.f32 %v193, %v194
    %v196 = vand.u32 %v195, 4294901760
    %197 = vmatpush1.msra.mxu0 %v196
    %198 = vmatprep.subr.mxu0 0.0
    %v199 = vand.u32 %v66, 4294901760
    %v200 = vsub.f32 %v66, %v199
    %v201 = vand.u32 %v200, 4294901760
    %v202 = vsub.f32 %v200, %v201
    %v203 = vand.u32 %v202, 4294901760
    %204 = vmatpush1.msra.mxu0 %v203
    %205 = vmatprep.subr.mxu0 0.0
    %v206 = vand.u32 %v65, 4294901760
    %v207 = vsub.f32 %v65, %v206
    %v208 = vand.u32 %v207, 4294901760
    %v209 = vsub.f32 %v207, %v208
    %v210 = vand.u32 %v209, 4294901760
    %211 = vmatpush1.msra.mxu0 %v210
    %212 = vmatprep.subr.mxu0 0.0
    %v213 = vand.u32 %v64, 4294901760
    %v214 = vsub.f32 %v64, %v213
    %v215 = vand.u32 %v214, 4294901760
    %v216 = vsub.f32 %v214, %v215
    %v217 = vand.u32 %v216, 4294901760
    %218 = vmatpush1.msra.mxu0 %v217
    %219 = vmatprep.subr.mxu0 0.0
    %v220 = vand.u32 %v63, 4294901760
    %v221 = vsub.f32 %v63, %v220
    %v222 = vand.u32 %v221, 4294901760
    %v223 = vsub.f32 %v221, %v222
    %v224 = vand.u32 %v223, 4294901760
    %225 = vmatpush1.msra.mxu0 %v224
    %226 = vmatprep.subr.mxu0 0.0
    %v227 = vand.u32 %v62, 4294901760
    %v228 = vsub.f32 %v62, %v227
    %v229 = vand.u32 %v228, 4294901760
    %v230 = vsub.f32 %v228, %v229
    %v231 = vand.u32 %v230, 4294901760
    %232 = vmatpush1.msra.mxu0 %v231
    %233 = vmatprep.subr.mxu0 0.0
    %v234 = vand.u32 %v61, 4294901760
    %v235 = vsub.f32 %v61, %v234
    %v236 = vand.u32 %v235, 4294901760
    %v237 = vsub.f32 %v235, %v236
    %v238 = vand.u32 %v237, 4294901760
    %239 = vmatpush1.msra.mxu0 %v238
    %240 = vmatprep.subr.mxu0 0.0
    %v241 = vand.u32 %v60, 4294901760
    %v242 = vsub.f32 %v60, %v241
    %v243 = vand.u32 %v242, 4294901760
    %v244 = vsub.f32 %v242, %v243
    %v245 = vand.u32 %v244, 4294901760
    %246 = vmatpush1.msra.mxu0 %v245
    %247 = vmatprep.subr.mxu0 0.0
    %v248 = vand.u32 %v59, 4294901760
    %v249 = vsub.f32 %v59, %v248
    %v250 = vand.u32 %v249, 4294901760
    %v251 = vsub.f32 %v249, %v250
    %v252 = vand.u32 %v251, 4294901760
    %253 = vmatpush1.msra.mxu0 %v252
    %254 = vmatprep.subr.mxu0 0.0
    %v255 = vand.u32 %v58, 4294901760
    %v256 = vsub.f32 %v58, %v255
    %v257 = vand.u32 %v256, 4294901760
    %v258 = vsub.f32 %v256, %v257
    %v259 = vand.u32 %v258, 4294901760
    %260 = vmatpush1.msra.mxu0 %v259
    %261 = vmatprep.subr.mxu0 0.0
    %v262 = vand.u32 %v57, 4294901760
    %v263 = vsub.f32 %v57, %v262
    %v264 = vand.u32 %v263, 4294901760
    %v265 = vsub.f32 %v263, %v264
    %v266 = vand.u32 %v265, 4294901760
    %267 = vmatpush1.msra.mxu0 %v266
    %268 = vmatprep.subr.mxu0 0.0
    %v269 = vand.u32 %v56, 4294901760
    %v270 = vsub.f32 %v56, %v269
    %v271 = vand.u32 %v270, 4294901760
    %v272 = vsub.f32 %v270, %v271
    %v273 = vand.u32 %v272, 4294901760
    %274 = vmatpush1.msra.mxu0 %v273
    %275 = vmatprep.subr.mxu0 0.0
    %276 = vmatpush2.msra.mxu0 0.0
    %277 = vmatprep.subr.mxu0 0.0
    %278 = vmatpush2.msra.mxu0 0.0
    %279 = vmatprep.subr.mxu0 0.0
    %280 = vmatpush2.msra.mxu0 0.0
    %281 = vmatprep.subr.mxu0 0.0
    %282 = vmatpush2.msra.mxu0 0.0
    %283 = vmatprep.subr.mxu0 0.0
    %284 = vmatpush2.msra.mxu0 0.0
    %285 = vmatprep.subr.mxu0 0.0
    %286 = vmatpush2.msra.mxu0 0.0
    %287 = vmatprep.subr.mxu0 0.0
    %288 = vmatpush2.msra.mxu0 0.0
    %289 = vmatprep.subr.mxu0 0.0
    %290 = vmatpush2.msra.mxu0 0.0
    %291 = vmatprep.subr.mxu0 0.0
    %292 = vmatpush2.msra.mxu0 0.0
    %293 = vmatprep.subr.mxu0 0.0
    %294 = vmatpush2.msra.mxu0 0.0
    %295 = vmatprep.subr.mxu0 0.0
    %296 = vmatpush2.msra.mxu0 0.0
    %297 = vmatprep.subr.mxu0 0.0
    %298 = vmatpush2.msra.mxu0 0.0
    %299 = vmatprep.subr.mxu0 0.0
    %300 = vmatpush2.msra.mxu0 0.0
    %301 = vmatprep.subr.mxu0 0.0
    %302 = vmatpush2.msra.mxu0 0.0
    %303 = vmatprep.subr.mxu0 0.0
    %304 = vmatpush2.msra.mxu0 0.0
    %305 = vmatprep.subr.mxu0 0.0
    %306 = vmatpush2.msra.mxu0 0.0
    %307 = vmatprep.mubr.f32.mxu0 0.0
    %v308 = vand.u32 %v55, 4294901760
    %309 = vmatmul.mubr.f32.gmra.mxu0 %v308
    %v310 = vpop.f32.mrf.mxu0
    %v311 = vadd.f32 %v160, %v310
    %v312 = vpop.f32.mrf.mxu0
    %313 = vdwg.mxu0
    %314 = vmatprep.subr.mxu0 0.0
    %v315 = vand.u32 %v71, 4294901760
    %v316 = vsub.f32 %v71, %v315
    %317 = vmatpush1.msra.mxu0 %v316
    %318 = vmatprep.subr.mxu0 0.0
    %v319 = vand.u32 %v70, 4294901760
    %v320 = vsub.f32 %v70, %v319
    %321 = vmatpush1.msra.mxu0 %v320
    %322 = vmatprep.subr.mxu0 0.0
    %v323 = vand.u32 %v69, 4294901760
    %v324 = vsub.f32 %v69, %v323
    %325 = vmatpush1.msra.mxu0 %v324
    %326 = vmatprep.subr.mxu0 0.0
    %v327 = vand.u32 %v68, 4294901760
    %v328 = vsub.f32 %v68, %v327
    %329 = vmatpush1.msra.mxu0 %v328
    %330 = vmatprep.subr.mxu0 0.0
    %v331 = vand.u32 %v67, 4294901760
    %v332 = vsub.f32 %v67, %v331
    %333 = vmatpush1.msra.mxu0 %v332
    %334 = vmatprep.subr.mxu0 0.0
    %v335 = vand.u32 %v66, 4294901760
    %v336 = vsub.f32 %v66, %v335
    %337 = vmatpush1.msra.mxu0 %v336
    %338 = vmatprep.subr.mxu0 0.0
    %v339 = vand.u32 %v65, 4294901760
    %v340 = vsub.f32 %v65, %v339
    %341 = vmatpush1.msra.mxu0 %v340
    %342 = vmatprep.subr.mxu0 0.0
    %v343 = vand.u32 %v64, 4294901760
    %v344 = vsub.f32 %v64, %v343
    %345 = vmatpush1.msra.mxu0 %v344
    %346 = vmatprep.subr.mxu0 0.0
    %v347 = vand.u32 %v63, 4294901760
    %v348 = vsub.f32 %v63, %v347
    %349 = vmatpush1.msra.mxu0 %v348
    %350 = vmatprep.subr.mxu0 0.0
    %v351 = vand.u32 %v62, 4294901760
    %v352 = vsub.f32 %v62, %v351
    %353 = vmatpush1.msra.mxu0 %v352
    %354 = vmatprep.subr.mxu0 0.0
    %v355 = vand.u32 %v61, 4294901760
    %v356 = vsub.f32 %v61, %v355
    %357 = vmatpush1.msra.mxu0 %v356
    %358 = vmatprep.subr.mxu0 0.0
    %v359 = vand.u32 %v60, 4294901760
    %v360 = vsub.f32 %v60, %v359
    %361 = vmatpush1.msra.mxu0 %v360
    %362 = vmatprep.subr.mxu0 0.0
    %v363 = vand.u32 %v59, 4294901760
    %v364 = vsub.f32 %v59, %v363
    %365 = vmatpush1.msra.mxu0 %v364
    %366 = vmatprep.subr.mxu0 0.0
    %v367 = vand.u32 %v58, 4294901760
    %v368 = vsub.f32 %v58, %v367
    %369 = vmatpush1.msra.mxu0 %v368
    %370 = vmatprep.subr.mxu0 0.0
    %v371 = vand.u32 %v57, 4294901760
    %v372 = vsub.f32 %v57, %v371
    %373 = vmatpush1.msra.mxu0 %v372
    %374 = vmatprep.subr.mxu0 0.0
    %v375 = vand.u32 %v56, 4294901760
    %v376 = vsub.f32 %v56, %v375
    %377 = vmatpush1.msra.mxu0 %v376
    %378 = vmatprep.subr.mxu0 0.0
    %379 = vmatpush2.msra.mxu0 0.0
    %380 = vmatprep.subr.mxu0 0.0
    %381 = vmatpush2.msra.mxu0 0.0
    %382 = vmatprep.subr.mxu0 0.0
    %383 = vmatpush2.msra.mxu0 0.0
    %384 = vmatprep.subr.mxu0 0.0
    %385 = vmatpush2.msra.mxu0 0.0
    %386 = vmatprep.subr.mxu0 0.0
    %387 = vmatpush2.msra.mxu0 0.0
    %388 = vmatprep.subr.mxu0 0.0
    %389 = vmatpush2.msra.mxu0 0.0
    %390 = vmatprep.subr.mxu0 0.0
    %391 = vmatpush2.msra.mxu0 0.0
    %392 = vmatprep.subr.mxu0 0.0
    %393 = vmatpush2.msra.mxu0 0.0
    %394 = vmatprep.subr.mxu0 0.0
    %395 = vmatpush2.msra.mxu0 0.0
    %396 = vmatprep.subr.mxu0 0.0
    %397 = vmatpush2.msra.mxu0 0.0
    %398 = vmatprep.subr.mxu0 0.0
    %399 = vmatpush2.msra.mxu0 0.0
    %400 = vmatprep.subr.mxu0 0.0
    %401 = vmatpush2.msra.mxu0 0.0
    %402 = vmatprep.subr.mxu0 0.0
    %403 = vmatpush2.msra.mxu0 0.0
    %404 = vmatprep.subr.mxu0 0.0
    %405 = vmatpush2.msra.mxu0 0.0
    %406 = vmatprep.subr.mxu0 0.0
    %407 = vmatpush2.msra.mxu0 0.0
    %408 = vmatprep.subr.mxu0 0.0
    %409 = vmatpush2.msra.mxu0 0.0
    %410 = vmatprep.mubr.f32.mxu0 0.0
    %v411 = vand.u32 %v55, 4294901760
    %v412 = vsub.f32 %v55, %v411
    %413 = vmatmul.mubr.f32.gmra.mxu0 %v412
    %v414 = vpop.f32.mrf.mxu0
    %v415 = vadd.f32 %v311, %v414
    %v416 = vpop.f32.mrf.mxu0
    %417 = vdwg.mxu0
    %418 = vmatprep.subr.mxu0 0.0
    %v419 = vand.u32 %v71, 4294901760
    %420 = vmatpush1.msra.mxu0 %v419
    %421 = vmatprep.subr.mxu0 0.0
    %v422 = vand.u32 %v70, 4294901760
    %423 = vmatpush1.msra.mxu0 %v422
    %424 = vmatprep.subr.mxu0 0.0
    %v425 = vand.u32 %v69, 4294901760
    %426 = vmatpush1.msra.mxu0 %v425
    %427 = vmatprep.subr.mxu0 0.0
    %v428 = vand.u32 %v68, 4294901760
    %429 = vmatpush1.msra.mxu0 %v428
    %430 = vmatprep.subr.mxu0 0.0
    %v431 = vand.u32 %v67, 4294901760
    %432 = vmatpush1.msra.mxu0 %v431
    %433 = vmatprep.subr.mxu0 0.0
    %v434 = vand.u32 %v66, 4294901760
    %435 = vmatpush1.msra.mxu0 %v434
    %436 = vmatprep.subr.mxu0 0.0
    %v437 = vand.u32 %v65, 4294901760
    %438 = vmatpush1.msra.mxu0 %v437
    %439 = vmatprep.subr.mxu0 0.0
    %v440 = vand.u32 %v64, 4294901760
    %441 = vmatpush1.msra.mxu0 %v440
    %442 = vmatprep.subr.mxu0 0.0
    %v443 = vand.u32 %v63, 4294901760
    %444 = vmatpush1.msra.mxu0 %v443
    %445 = vmatprep.subr.mxu0 0.0
    %v446 = vand.u32 %v62, 4294901760
    %447 = vmatpush1.msra.mxu0 %v446
    %448 = vmatprep.subr.mxu0 0.0
    %v449 = vand.u32 %v61, 4294901760
    %450 = vmatpush1.msra.mxu0 %v449
    %451 = vmatprep.subr.mxu0 0.0
    %v452 = vand.u32 %v60, 4294901760
    %453 = vmatpush1.msra.mxu0 %v452
    %454 = vmatprep.subr.mxu0 0.0
    %v455 = vand.u32 %v59, 4294901760
    %456 = vmatpush1.msra.mxu0 %v455
    %457 = vmatprep.subr.mxu0 0.0
    %v458 = vand.u32 %v58, 4294901760
    %459 = vmatpush1.msra.mxu0 %v458
    %460 = vmatprep.subr.mxu0 0.0
    %v461 = vand.u32 %v57, 4294901760
    %462 = vmatpush1.msra.mxu0 %v461
    %463 = vmatprep.subr.mxu0 0.0
    %v464 = vand.u32 %v56, 4294901760
    %465 = vmatpush1.msra.mxu0 %v464
    %466 = vmatprep.subr.mxu0 0.0
    %467 = vmatpush2.msra.mxu0 0.0
    %468 = vmatprep.subr.mxu0 0.0
    %469 = vmatpush2.msra.mxu0 0.0
    %470 = vmatprep.subr.mxu0 0.0
    %471 = vmatpush2.msra.mxu0 0.0
    %472 = vmatprep.subr.mxu0 0.0
    %473 = vmatpush2.msra.mxu0 0.0
    %474 = vmatprep.subr.mxu0 0.0
    %475 = vmatpush2.msra.mxu0 0.0
    %476 = vmatprep.subr.mxu0 0.0
    %477 = vmatpush2.msra.mxu0 0.0
    %478 = vmatprep.subr.mxu0 0.0
    %479 = vmatpush2.msra.mxu0 0.0
    %480 = vmatprep.subr.mxu0 0.0
    %481 = vmatpush2.msra.mxu0 0.0
    %482 = vmatprep.subr.mxu0 0.0
    %483 = vmatpush2.msra.mxu0 0.0
    %484 = vmatprep.subr.mxu0 0.0
    %485 = vmatpush2.msra.mxu0 0.0
    %486 = vmatprep.subr.mxu0 0.0
    %487 = vmatpush2.msra.mxu0 0.0
    %488 = vmatprep.subr.mxu0 0.0
    %489 = vmatpush2.msra.mxu0 0.0
    %490 = vmatprep.subr.mxu0 0.0
    %491 = vmatpush2.msra.mxu0 0.0
    %492 = vmatprep.subr.mxu0 0.0
    %493 = vmatpush2.msra.mxu0 0.0
    %494 = vmatprep.subr.mxu0 0.0
    %495 = vmatpush2.msra.mxu0 0.0
    %496 = vmatprep.subr.mxu0 0.0
    %497 = vmatpush2.msra.mxu0 0.0
    %498 = vmatprep.mubr.f32.mxu0 0.0
    %v499 = vand.u32 %v55, 4294901760
    %v500 = vsub.f32 %v55, %v499
    %v501 = vand.u32 %v500, 4294901760
    %502 = vmatmul.mubr.f32.gmra.mxu0 %v501
    %v503 = vpop.f32.mrf.mxu0
    %v504 = vadd.f32 %v415, %v503
    %v505 = vpop.f32.mrf.mxu0
    %506 = vdwg.mxu0
    %507 = vmatprep.subr.mxu0 0.0
    %v508 = vand.u32 %v71, 4294901760
    %v509 = vsub.f32 %v71, %v508
    %v510 = vand.u32 %v509, 4294901760
    %511 = vmatpush1.msra.mxu0 %v510
    %512 = vmatprep.subr.mxu0 0.0
    %v513 = vand.u32 %v70, 4294901760
    %v514 = vsub.f32 %v70, %v513
    %v515 = vand.u32 %v514, 4294901760
    %516 = vmatpush1.msra.mxu0 %v515
    %517 = vmatprep.subr.mxu0 0.0
    %v518 = vand.u32 %v69, 4294901760
    %v519 = vsub.f32 %v69, %v518
    %v520 = vand.u32 %v519, 4294901760
    %521 = vmatpush1.msra.mxu0 %v520
    %522 = vmatprep.subr.mxu0 0.0
    %v523 = vand.u32 %v68, 4294901760
    %v524 = vsub.f32 %v68, %v523
    %v525 = vand.u32 %v524, 4294901760
    %526 = vmatpush1.msra.mxu0 %v525
    %527 = vmatprep.subr.mxu0 0.0
    %v528 = vand.u32 %v67, 4294901760
    %v529 = vsub.f32 %v67, %v528
    %v530 = vand.u32 %v529, 4294901760
    %531 = vmatpush1.msra.mxu0 %v530
    %532 = vmatprep.subr.mxu0 0.0
    %v533 = vand.u32 %v66, 4294901760
    %v534 = vsub.f32 %v66, %v533
    %v535 = vand.u32 %v534, 4294901760
    %536 = vmatpush1.msra.mxu0 %v535
    %537 = vmatprep.subr.mxu0 0.0
    %v538 = vand.u32 %v65, 4294901760
    %v539 = vsub.f32 %v65, %v538
    %v540 = vand.u32 %v539, 4294901760
    %541 = vmatpush1.msra.mxu0 %v540
    %542 = vmatprep.subr.mxu0 0.0
    %v543 = vand.u32 %v64, 4294901760
    %v544 = vsub.f32 %v64, %v543
    %v545 = vand.u32 %v544, 4294901760
    %546 = vmatpush1.msra.mxu0 %v545
    %547 = vmatprep.subr.mxu0 0.0
    %v548 = vand.u32 %v63, 4294901760
    %v549 = vsub.f32 %v63, %v548
    %v550 = vand.u32 %v549, 4294901760
    %551 = vmatpush1.msra.mxu0 %v550
    %552 = vmatprep.subr.mxu0 0.0
    %v553 = vand.u32 %v62, 4294901760
    %v554 = vsub.f32 %v62, %v553
    %v555 = vand.u32 %v554, 4294901760
    %556 = vmatpush1.msra.mxu0 %v555
    %557 = vmatprep.subr.mxu0 0.0
    %v558 = vand.u32 %v61, 4294901760
    %v559 = vsub.f32 %v61, %v558
    %v560 = vand.u32 %v559, 4294901760
    %561 = vmatpush1.msra.mxu0 %v560
    %562 = vmatprep.subr.mxu0 0.0
    %v563 = vand.u32 %v60, 4294901760
    %v564 = vsub.f32 %v60, %v563
    %v565 = vand.u32 %v564, 4294901760
    %566 = vmatpush1.msra.mxu0 %v565
    %567 = vmatprep.subr.mxu0 0.0
    %v568 = vand.u32 %v59, 4294901760
    %v569 = vsub.f32 %v59, %v568
    %v570 = vand.u32 %v569, 4294901760
    %571 = vmatpush1.msra.mxu0 %v570
    %572 = vmatprep.subr.mxu0 0.0
    %v573 = vand.u32 %v58, 4294901760
    %v574 = vsub.f32 %v58, %v573
    %v575 = vand.u32 %v574, 4294901760
    %576 = vmatpush1.msra.mxu0 %v575
    %577 = vmatprep.subr.mxu0 0.0
    %v578 = vand.u32 %v57, 4294901760
    %v579 = vsub.f32 %v57, %v578
    %v580 = vand.u32 %v579, 4294901760
    %581 = vmatpush1.msra.mxu0 %v580
    %582 = vmatprep.subr.mxu0 0.0
    %v583 = vand.u32 %v56, 4294901760
    %v584 = vsub.f32 %v56, %v583
    %v585 = vand.u32 %v584, 4294901760
    %586 = vmatpush1.msra.mxu0 %v585
    %587 = vmatprep.subr.mxu0 0.0
    %588 = vmatpush2.msra.mxu0 0.0
    %589 = vmatprep.subr.mxu0 0.0
    %590 = vmatpush2.msra.mxu0 0.0
    %591 = vmatprep.subr.mxu0 0.0
    %592 = vmatpush2.msra.mxu0 0.0
    %593 = vmatprep.subr.mxu0 0.0
    %594 = vmatpush2.msra.mxu0 0.0
    %595 = vmatprep.subr.mxu0 0.0
    %596 = vmatpush2.msra.mxu0 0.0
    %597 = vmatprep.subr.mxu0 0.0
    %598 = vmatpush2.msra.mxu0 0.0
    %599 = vmatprep.subr.mxu0 0.0
    %600 = vmatpush2.msra.mxu0 0.0
    %601 = vmatprep.subr.mxu0 0.0
    %602 = vmatpush2.msra.mxu0 0.0
    %603 = vmatprep.subr.mxu0 0.0
    %604 = vmatpush2.msra.mxu0 0.0
    %605 = vmatprep.subr.mxu0 0.0
    %606 = vmatpush2.msra.mxu0 0.0
    %607 = vmatprep.subr.mxu0 0.0
    %608 = vmatpush2.msra.mxu0 0.0
    %609 = vmatprep.subr.mxu0 0.0
    %610 = vmatpush2.msra.mxu0 0.0
    %611 = vmatprep.subr.mxu0 0.0
    %612 = vmatpush2.msra.mxu0 0.0
    %613 = vmatprep.subr.mxu0 0.0
    %614 = vmatpush2.msra.mxu0 0.0
    %615 = vmatprep.subr.mxu0 0.0
    %616 = vmatpush2.msra.mxu0 0.0
    %617 = vmatprep.subr.mxu0 0.0
    %618 = vmatpush2.msra.mxu0 0.0
    %619 = vmatprep.mubr.f32.mxu0 0.0
    %v620 = vand.u32 %v55, 4294901760
    %621 = vmatmul.mubr.f32.gmra.mxu0 %v620
    %v622 = vpop.f32.mrf.mxu0
    %v623 = vadd.f32 %v504, %v622
    %v624 = vpop.f32.mrf.mxu0
    %625 = vdwg.mxu0
    %626 = vmatprep.subr.mxu0 0.0
    %v627 = vand.u32 %v71, 4294901760
    %628 = vmatpush1.msra.mxu0 %v627
    %629 = vmatprep.subr.mxu0 0.0
    %v630 = vand.u32 %v70, 4294901760
    %631 = vmatpush1.msra.mxu0 %v630
    %632 = vmatprep.subr.mxu0 0.0
    %v633 = vand.u32 %v69, 4294901760
    %634 = vmatpush1.msra.mxu0 %v633
    %635 = vmatprep.subr.mxu0 0.0
    %v636 = vand.u32 %v68, 4294901760
    %637 = vmatpush1.msra.mxu0 %v636
    %638 = vmatprep.subr.mxu0 0.0
    %v639 = vand.u32 %v67, 4294901760
    %640 = vmatpush1.msra.mxu0 %v639
    %641 = vmatprep.subr.mxu0 0.0
    %v642 = vand.u32 %v66, 4294901760
    %643 = vmatpush1.msra.mxu0 %v642
    %644 = vmatprep.subr.mxu0 0.0
    %v645 = vand.u32 %v65, 4294901760
    %646 = vmatpush1.msra.mxu0 %v645
    %647 = vmatprep.subr.mxu0 0.0
    %v648 = vand.u32 %v64, 4294901760
    %649 = vmatpush1.msra.mxu0 %v648
    %650 = vmatprep.subr.mxu0 0.0
    %v651 = vand.u32 %v63, 4294901760
    %652 = vmatpush1.msra.mxu0 %v651
    %653 = vmatprep.subr.mxu0 0.0
    %v654 = vand.u32 %v62, 4294901760
    %655 = vmatpush1.msra.mxu0 %v654
    %656 = vmatprep.subr.mxu0 0.0
    %v657 = vand.u32 %v61, 4294901760
    %658 = vmatpush1.msra.mxu0 %v657
    %659 = vmatprep.subr.mxu0 0.0
    %v660 = vand.u32 %v60, 4294901760
    %661 = vmatpush1.msra.mxu0 %v660
    %662 = vmatprep.subr.mxu0 0.0
    %v663 = vand.u32 %v59, 4294901760
    %664 = vmatpush1.msra.mxu0 %v663
    %665 = vmatprep.subr.mxu0 0.0
    %v666 = vand.u32 %v58, 4294901760
    %667 = vmatpush1.msra.mxu0 %v666
    %668 = vmatprep.subr.mxu0 0.0
    %v669 = vand.u32 %v57, 4294901760
    %670 = vmatpush1.msra.mxu0 %v669
    %671 = vmatprep.subr.mxu0 0.0
    %v672 = vand.u32 %v56, 4294901760
    %673 = vmatpush1.msra.mxu0 %v672
    %674 = vmatprep.subr.mxu0 0.0
    %675 = vmatpush2.msra.mxu0 0.0
    %676 = vmatprep.subr.mxu0 0.0
    %677 = vmatpush2.msra.mxu0 0.0
    %678 = vmatprep.subr.mxu0 0.0
    %679 = vmatpush2.msra.mxu0 0.0
    %680 = vmatprep.subr.mxu0 0.0
    %681 = vmatpush2.msra.mxu0 0.0
    %682 = vmatprep.subr.mxu0 0.0
    %683 = vmatpush2.msra.mxu0 0.0
    %684 = vmatprep.subr.mxu0 0.0
    %685 = vmatpush2.msra.mxu0 0.0
    %686 = vmatprep.subr.mxu0 0.0
    %687 = vmatpush2.msra.mxu0 0.0
    %688 = vmatprep.subr.mxu0 0.0
    %689 = vmatpush2.msra.mxu0 0.0
    %690 = vmatprep.subr.mxu0 0.0
    %691 = vmatpush2.msra.mxu0 0.0
    %692 = vmatprep.subr.mxu0 0.0
    %693 = vmatpush2.msra.mxu0 0.0
    %694 = vmatprep.subr.mxu0 0.0
    %695 = vmatpush2.msra.mxu0 0.0
    %696 = vmatprep.subr.mxu0 0.0
    %697 = vmatpush2.msra.mxu0 0.0
    %698 = vmatprep.subr.mxu0 0.0
    %699 = vmatpush2.msra.mxu0 0.0
    %700 = vmatprep.subr.mxu0 0.0
    %701 = vmatpush2.msra.mxu0 0.0
    %702 = vmatprep.subr.mxu0 0.0
    %703 = vmatpush2.msra.mxu0 0.0
    %704 = vmatprep.subr.mxu0 0.0
    %705 = vmatpush2.msra.mxu0 0.0
    %706 = vmatprep.mubr.f32.mxu0 0.0
    %v707 = vand.u32 %v55, 4294901760
    %708 = vmatmul.mubr.f32.gmra.mxu0 %v707
    %v709 = vpop.f32.mrf.mxu0
    %v710 = vadd.f32 %v623, %v709
    %v711 = vpop.f32.mrf.mxu0
    %712 = vdwg.mxu0
    %v713 = vsub.f32 0.0, %v710
    %v714 = vmul.f32 %v713, 1.442695
    %v715 = vpow.pop %v714
    %v716 = vsub.f32 1.0, %v715
    %v717 = vmul.f32 %v716, %v716
    %v718 = vmul.f32 %v717, %v710
    %v719 = vrot.slane %v718, 4
    %v720 = vadd.f32 %v718, %v719
    %v721 = vrot.slane %v720, 2
    %v722 = vadd.f32 %v720, %v721
    %v723 = vrot.slane %v722, 1
    %v724 = vadd.f32 %v722, %v723
    %725 = vst [vmem:[#allocation8] sm:$0x1] %v724
    // Predicated region
    $region26: #{tpu_custom_call.1} parent=1 // pred_check
      _
    $region27: #{tpu_custom_call.1} parent=1 // pred_check_branch
      %727 = sbr.rel (0) target = $region29
    $region28: #{tpu_custom_call.1} parent=1 // pred_region
      %s729 = ssub.s32 16, 16
      %730 = vsyncadd [#allocation4], %s729
      %s732 = sshll.u32 [#allocation8], 4
      %s733 = int_to_ptr.vmem [resolvable:$true] %s732
      %735 = dma.vmem_to_hbm [thread:$0]  %s733, 16, %s3, [#allocation4]
    $region29: #{tpu_custom_call.1} parent=1 // pred_fallthru
      _
    // Predicated region
    $region30: #{tpu_custom_call.1} parent=1 // pred_check
      _
    $region31: #{tpu_custom_call.1} parent=1 // pred_check_branch
      %737 = sbr.rel (0) target = $region33
    $region32: #{tpu_custom_call.1} parent=1 // pred_region
      %738 = dma.done [#allocation4], 16
    $region33: #{tpu_custom_call.1} parent=1 // pred_fallthru
      _
    %739 = vsyncpa [#allocation3], 1
    %740 = vsyncpa [#allocation6], 1
    %741 = vsyncpa [#allocation4], 1

</llo_original>
